<compile_context>
chip_gen: v7x
topology: tpu7x:2x2x1
jax: 0.10.0
libtpu: 0.0.40
codegen_flags: <defaults>
</compile_context>

<pallas_src>
import jax
import jax.numpy as jnp
from jax.experimental import pallas as pl
from jax.experimental.pallas import tpu as pltpu


# --------------------------------------------------------------------------
# Kernel
# --------------------------------------------------------------------------
def _residual_block_kernel(x_ref, bn_ref, w1_ref, w2_ref, o_ref):
    """One grid step = one block of Nblk samples, packed as (Nblk, C*L).

    x_ref  : (Nblk, CL)  input rows (io dtype), c-major / l-minor packing
    bn_ref : (4, CL)     f32 rows [scale1, bias1, scale2, bias2] (folded BN)
    w*_ref : (CL, CL)    Conv1d as banded matrix (matmul dtype)
    o_ref  : (Nblk, CL)  output rows (io dtype)
    """
    bn = bn_ref[...]                                   # (4, CL) f32
    s1 = bn[0:1, :]
    b1 = bn[1:2, :]
    s2 = bn[2:3, :]
    b2 = bn[3:4, :]

    # ---- BN1 (folded, inference) + ReLU --------------------------------
    h = jnp.maximum(x_ref[...].astype(jnp.float32) * s1 + b1, 0.0)

    # ---- Conv1: single MXU matmul against the banded weight matrix -----
    h = jnp.dot(h.astype(w1_ref.dtype), w1_ref[...],
                preferred_element_type=jnp.float32)

    # ---- BN2 (folded) + ReLU; dropout in eval mode == identity ---------
    h = jnp.maximum(h * s2 + b2, 0.0)

    # ---- Conv2 ----------------------------------------------------------
    h = jnp.dot(h.astype(w2_ref.dtype), w2_ref[...],
                preferred_element_type=jnp.float32)

    # ---- Residual add (re-read x; no value held live across matmuls) ----
    o_ref[...] = (h + x_ref[...].astype(jnp.float32)).astype(o_ref.dtype)


# --------------------------------------------------------------------------
# pallas_call wrapper (packed layout)
# --------------------------------------------------------------------------
def _choose_nblk(N, block_rows):
    """Pick row-block size: big enough to amortize step overhead, multiple of 8,
    and (when N > 8) giving >= 2 grid steps so v7x's 2 TensorCores share work."""
    if N <= 8:
        return N                                    # full dim -> valid block
    nblk = min(block_rows, -(-N // 2))              # at least 2 grid steps
    nblk = ((nblk + 7) // 8) * 8                    # (8, 128) tiling constraint
    return min(nblk, N)


def residual_block_pallas(x_packed, bn_packed, W1, W2, *, block_rows=8192):
    """x_packed: (N, C*L) rows (f32 or bf16).  Returns (N, C*L) in same dtype."""
    N, LC = x_packed.shape
    nblk = _choose_nblk(N, block_rows)
    grid = (pl.cdiv(N, nblk),)

    io_bytes = x_packed.dtype.itemsize
    # VMEM estimate: double-buffered in/out blocks + f32 intermediates + weights.
    est = (4 * nblk * LC * io_bytes          # x + out blocks, double-buffered
           + 3 * nblk * LC * 4               # f32 intermediates / headroom
           + 2 * (W1.size * W1.dtype.itemsize + W2.size * W2.dtype.itemsize)
           + 2 * bn_packed.size * 4)
    vmem_limit = int(min(max(2 * est, 32 << 20), 64 << 20))   # v7x-safe cap

    cost = pl.CostEstimate(
        flops=4 * N * LC * LC,               # two (N,LC)@(LC,LC) matmuls
        transcendentals=0,
        bytes_accessed=(2 * N * LC * io_bytes
                        + W1.size * W1.dtype.itemsize
                        + W2.size * W2.dtype.itemsize
                        + bn_packed.size * 4))

    return pl.pallas_call(
        _residual_block_kernel,
        out_shape=jax.ShapeDtypeStruct((N, LC), x_packed.dtype),
        grid_spec=pltpu.PrefetchScalarGridSpec(
            num_scalar_prefetch=0,
            grid=grid,
            in_specs=[
                pl.BlockSpec((nblk, LC), lambda n: (n, 0)),   # x rows
                pl.BlockSpec((4, LC),    lambda n: (0, 0)),   # fused BN rows
                pl.BlockSpec((LC, LC),   lambda n: (0, 0)),   # W1 banded
                pl.BlockSpec((LC, LC),   lambda n: (0, 0)),   # W2 banded
            ],
            out_specs=pl.BlockSpec((nblk, LC), lambda n: (n, 0)),
        ),
        compiler_params=pltpu.CompilerParams(
            dimension_semantics=("parallel",),
            vmem_limit_bytes=vmem_limit),
        cost_estimate=cost,
    )(x_packed, bn_packed, W1, W2)


# --------------------------------------------------------------------------
# Wrapper-side glue: BN folding, conv -> banded matrix (c-major packing)
# --------------------------------------------------------------------------
def _conv1d_as_band_matrix(w_oik, L, padding):
    """Fold a PyTorch Conv1d weight (C_out, C_in, K), stride=1, zero padding,
    into a (C_in*L, C_out*L) matrix Wb for c-major / l-minor packing, so that
      x_packed @ Wb == packed conv1d(x)     with x_packed[n, ci*L + m] = x[n, ci, m].
    Wb[ci*L + m, co*L + l] = w[co, ci, m - l + padding]  if 0 <= m-l+padding < K else 0.
    """
    Co, Ci, K = w_oik.shape
    w_kic = jnp.transpose(w_oik, (2, 1, 0))              # (K, Ci, Co)
    m = jnp.arange(L)[:, None]                            # input position
    l = jnp.arange(L)[None, :]                            # output position
    tap = m - l + padding                                  # (L, L)
    valid = (tap >= 0) & (tap < K)
    blocks = w_kic[jnp.clip(tap, 0, K - 1)]                # (m, l, Ci, Co)
    blocks = jnp.where(valid[:, :, None, None], blocks, 0.0)
    # (m, l, ci, co) -> (ci, m, co, l) -> (Ci*L, Co*L)
    return jnp.transpose(blocks, (2, 0, 3, 1)).reshape(Ci * L, Co * L)


def residual_block_forward(x_ncl,
                           gamma1, beta1, mean1, var1, w1,
                           gamma2, beta2, mean2, var2, w2,
                           *, padding, stride=1, eps=1e-5,
                           matmul_dtype=jnp.float32, io_dtype=None,
                           block_rows=8192):
    """x_ncl: (N, C, L) (PyTorch Conv1d layout). Returns (N, C, L) in io_dtype."""
    N, C, L = x_ncl.shape
    Co, Ci, K = w1.shape
    assert stride == 1 and 2 * padding == K - 1, \
        "residual add requires a 'same' conv: stride=1 and 2*padding == K-1"
    if io_dtype is None:
        io_dtype = x_ncl.dtype

    # Fold BN (inference mode) into per-channel scale/bias; repeat over L so the
    # vectors line up with the c-major / l-minor packed lane layout.
    s1 = gamma1 / jnp.sqrt(var1 + eps)
    b1 = beta1 - mean1 * s1
    s2 = gamma2 / jnp.sqrt(var2 + eps)
    b2 = beta2 - mean2 * s2
    bn_packed = jnp.stack([jnp.repeat(s1, L), jnp.repeat(b1, L),
                           jnp.repeat(s2, L), jnp.repeat(b2, L)],
                          axis=0).astype(jnp.float32)          # (4, C*L)

    # Conv1d -> banded (C*L, C*L) matrices; bf16 weights optional for v6e/v7x MXU.
    W1 = _conv1d_as_band_matrix(w1, L, padding).astype(matmul_dtype)
    W2 = _conv1d_as_band_matrix(w2, L, padding).astype(matmul_dtype)

    # FREE reshape (no transpose): (N, C, L) -> (N, C*L), c-major / l-minor.
    x_packed = x_ncl.reshape(N, C * L).astype(io_dtype)

    out_packed = residual_block_pallas(x_packed, bn_packed, W1, W2,
                                       block_rows=block_rows)

    # FREE reshape back to NCL.
    return out_packed.reshape(N, C, L)


# --------------------------------------------------------------------------
# Pure-JAX reference (eval-mode BN, no dropout), original NCL layout
# --------------------------------------------------------------------------
def _reference_jax(x_ncl, g1, be1, m1, v1, w1, g2, be2, m2, v2, w2,
                   *, padding, eps=1e-5):
    def bn(x, g, b, m, v):
        return (x - m[None, :, None]) / jnp.sqrt(v[None, :, None] + eps) \
               * g[None, :, None] + b[None, :, None]

    def conv1d(x, w):  # x: (N, C, L), w: (Co, Ci, K), stride 1
        N, C, L = x.shape
        Co, Ci, K = w.shape
        xp = jnp.pad(x, ((0, 0), (0, 0), (padding, padding)))
        out = jnp.zeros((N, Co, L), jnp.float32)
        for k in range(K):
            out = out + jnp.einsum('ncl,oc->nol', xp[:, :, k:k + L], w[:, :, k])
        return out

    h = jnp.maximum(bn(x_ncl, g1, be1, m1, v1), 0.0)
    h = conv1d(h, w1)
    h = jnp.maximum(bn(h, g2, be2, m2, v2), 0.0)
    h = conv1d(h, w2)
    return h + x_ncl


if __name__ == "__main__":
    # Module hyper-params (shape-consistent with the residual add):
    in_ch, kernel_size, stride, padding, dropout = 8, 3, 1, 1, 0.1
    N, L = 2, 16
    eps = 1e-5

    key = jax.random.PRNGKey(0)
    kx, kw1, kw2 = jax.random.split(key, 3)

    # Input in PyTorch NCL layout.
    x_ncl = jax.random.normal(kx, (N, in_ch, L), dtype=jnp.float32)

    # Deterministic parameter init (synthetic, not a checkpoint load).
    gamma1 = jnp.linspace(0.8, 1.2, in_ch, dtype=jnp.float32)
    beta1 = jnp.linspace(-0.1, 0.1, in_ch, dtype=jnp.float32)
    rmean1 = 0.05 * jnp.arange(in_ch, dtype=jnp.float32)
    rvar1 = 1.0 + 0.1 * jnp.arange(in_ch, dtype=jnp.float32)
    gamma2 = jnp.linspace(1.1, 0.9, in_ch, dtype=jnp.float32)
    beta2 = jnp.linspace(0.1, -0.1, in_ch, dtype=jnp.float32)
    rmean2 = -0.03 * jnp.arange(in_ch, dtype=jnp.float32)
    rvar2 = 1.0 + 0.05 * jnp.arange(in_ch, dtype=jnp.float32)
    # Conv weights, PyTorch shape (C_out, C_in, K), bias=False.
    w1 = 0.1 * jax.random.normal(kw1, (in_ch, in_ch, kernel_size), dtype=jnp.float32)
    w2 = 0.1 * jax.random.normal(kw2, (in_ch, in_ch, kernel_size), dtype=jnp.float32)

    ref = _reference_jax(x_ncl, gamma1, beta1, rmean1, rvar1, w1,
                         gamma2, beta2, rmean2, rvar2, w2,
                         padding=padding, eps=eps)

    # --- f32 path (exact module semantics; v5e-preferred config) ---
    out_f32 = residual_block_forward(
        x_ncl, gamma1, beta1, rmean1, rvar1, w1,
        gamma2, beta2, rmean2, rvar2, w2,
        padding=padding, stride=stride, eps=eps,
        matmul_dtype=jnp.float32, io_dtype=jnp.float32)
    out_f32 = jax.block_until_ready(out_f32)
    assert out_f32.shape == x_ncl.shape
    assert jnp.allclose(out_f32, ref, atol=1e-4, rtol=1e-4), \
        float(jnp.max(jnp.abs(out_f32 - ref)))

    # --- bf16 I/O + bf16 weights path (v6e/v7x: halves HBM traffic, f32 accum) ---
    out_bf16 = residual_block_forward(
        x_ncl, gamma1, beta1, rmean1, rvar1, w1,
        gamma2, beta2, rmean2, rvar2, w2,
        padding=padding, stride=stride, eps=eps,
        matmul_dtype=jnp.bfloat16, io_dtype=jnp.bfloat16)
    out_bf16 = jax.block_until_ready(out_bf16)
    assert out_bf16.dtype == jnp.bfloat16
    assert jnp.allclose(out_bf16.astype(jnp.float32), ref, atol=2e-1, rtol=1e-1), \
        float(jnp.max(jnp.abs(out_bf16.astype(jnp.float32) - ref)))

    print("KERNEL_OK")
</pallas_src>

<mosaic_0001>
module attributes {stable_mosaic.version = 11 : i64} {
  func.func @_residual_block_kernel(%arg0: i32, %arg1: memref<2x128xf32, #tpu.memory_space<vmem>>, %arg2: memref<4x128xf32, #tpu.memory_space<vmem>>, %arg3: memref<128x128xf32, #tpu.memory_space<vmem>>, %arg4: memref<128x128xf32, #tpu.memory_space<vmem>>, %arg5: memref<2x128xf32, #tpu.memory_space<vmem>>) attributes {dimension_semantics = [#tpu.dimension_semantics<parallel>], iteration_bounds = array<i64: 1>, scalar_prefetch = 0 : i64, scratch_operands = 0 : i64, tpu.core_type = #tpu.core_type<tc>, window_params = [{transform_indices = @transform_0, window_bounds = array<i64: 2, 128>}, {pipeline_mode = #tpu.pipeline_mode<synchronous>, transform_indices = @transform_1, window_bounds = array<i64: 4, 128>}, {pipeline_mode = #tpu.pipeline_mode<synchronous>, transform_indices = @transform_2, window_bounds = array<i64: 128, 128>}, {pipeline_mode = #tpu.pipeline_mode<synchronous>, transform_indices = @transform_3, window_bounds = array<i64: 128, 128>}, {transform_indices = @transform_4, window_bounds = array<i64: 2, 128>}]} {
    %c0 = arith.constant 0 : index
    %c0_0 = arith.constant 0 : index
    %0 = vector.load %arg2[%c0, %c0_0] : memref<4x128xf32, #tpu.memory_space<vmem>>, vector<4x128xf32>
    %1 = vector.extract_strided_slice %0 {offsets = [0, 0], sizes = [1, 128], strides = [1, 1]} : vector<4x128xf32> to vector<1x128xf32>
    %2 = vector.extract_strided_slice %0 {offsets = [1, 0], sizes = [1, 128], strides = [1, 1]} : vector<4x128xf32> to vector<1x128xf32>
    %3 = vector.extract_strided_slice %0 {offsets = [2, 0], sizes = [1, 128], strides = [1, 1]} : vector<4x128xf32> to vector<1x128xf32>
    %4 = vector.extract_strided_slice %0 {offsets = [3, 0], sizes = [1, 128], strides = [1, 1]} : vector<4x128xf32> to vector<1x128xf32>
    %c0_1 = arith.constant 0 : index
    %c0_2 = arith.constant 0 : index
    %5 = vector.load %arg1[%c0_1, %c0_2] : memref<2x128xf32, #tpu.memory_space<vmem>>, vector<2x128xf32>
    %6 = vector.broadcast %1 : vector<1x128xf32> to vector<2x128xf32>
    %7 = arith.mulf %5, %6 : vector<2x128xf32>
    %8 = vector.broadcast %2 : vector<1x128xf32> to vector<2x128xf32>
    %9 = arith.addf %7, %8 : vector<2x128xf32>
    %cst = arith.constant 0.000000e+00 : f32
    %10 = vector.broadcast %cst : f32 to vector<2x128xf32>
    %11 = arith.maximumf %9, %10 : vector<2x128xf32>
    %c0_3 = arith.constant 0 : index
    %c0_4 = arith.constant 0 : index
    %12 = vector.load %arg3[%c0_3, %c0_4] : memref<128x128xf32, #tpu.memory_space<vmem>>, vector<128x128xf32>
    %cst_5 = arith.constant dense<0.000000e+00> : vector<2x128xf32>
    %13 = tpu.matmul %11, %12, %cst_5 {dimension_numbers = #tpu.dot_dimension_numbers<[1], [0], [0], [1], [0, 0, 1, 1], [], []>} : vector<2x128xf32>, vector<128x128xf32>, vector<2x128xf32> -> vector<2x128xf32>
    %14 = vector.broadcast %3 : vector<1x128xf32> to vector<2x128xf32>
    %15 = arith.mulf %13, %14 : vector<2x128xf32>
    %16 = vector.broadcast %4 : vector<1x128xf32> to vector<2x128xf32>
    %17 = arith.addf %15, %16 : vector<2x128xf32>
    %cst_6 = arith.constant 0.000000e+00 : f32
    %18 = vector.broadcast %cst_6 : f32 to vector<2x128xf32>
    %19 = arith.maximumf %17, %18 : vector<2x128xf32>
    %c0_7 = arith.constant 0 : index
    %c0_8 = arith.constant 0 : index
    %20 = vector.load %arg4[%c0_7, %c0_8] : memref<128x128xf32, #tpu.memory_space<vmem>>, vector<128x128xf32>
    %cst_9 = arith.constant dense<0.000000e+00> : vector<2x128xf32>
    %21 = tpu.matmul %19, %20, %cst_9 {dimension_numbers = #tpu.dot_dimension_numbers<[1], [0], [0], [1], [0, 0, 1, 1], [], []>} : vector<2x128xf32>, vector<128x128xf32>, vector<2x128xf32> -> vector<2x128xf32>
    %c0_10 = arith.constant 0 : index
    %c0_11 = arith.constant 0 : index
    %22 = vector.load %arg1[%c0_10, %c0_11] : memref<2x128xf32, #tpu.memory_space<vmem>>, vector<2x128xf32>
    %23 = arith.addf %21, %22 : vector<2x128xf32>
    %c0_12 = arith.constant 0 : index
    %c0_13 = arith.constant 0 : index
    %24 = vector.load %arg5[%c0_12, %c0_13] : memref<2x128xf32, #tpu.memory_space<vmem>>, vector<2x128xf32>
    tpu.vector_store %arg5[%c0_12, %c0_13], %23 {strides = array<i32>} : memref<2x128xf32, #tpu.memory_space<vmem>>, vector<2x128xf32>,
    return
  }
  func.func @transform_0(%arg0: i32) -> (i32, i32) {
    %c0_i32 = arith.constant 0 : i32
    %c0_i32_0 = arith.constant 0 : i32
    return %arg0, %c0_i32 : i32, i32
  }
  func.func @transform_1(%arg0: i32) -> (i32, i32) {
    %c0_i32 = arith.constant 0 : i32
    %c0_i32_0 = arith.constant 0 : i32
    %c0_i32_1 = arith.constant 0 : i32
    return %c0_i32, %c0_i32_0 : i32, i32
  }
  func.func @transform_2(%arg0: i32) -> (i32, i32) {
    %c0_i32 = arith.constant 0 : i32
    %c0_i32_0 = arith.constant 0 : i32
    %c0_i32_1 = arith.constant 0 : i32
    return %c0_i32, %c0_i32_0 : i32, i32
  }
  func.func @transform_3(%arg0: i32) -> (i32, i32) {
    %c0_i32 = arith.constant 0 : i32
    %c0_i32_0 = arith.constant 0 : i32
    %c0_i32_1 = arith.constant 0 : i32
    return %c0_i32, %c0_i32_0 : i32, i32
  }
  func.func @transform_4(%arg0: i32) -> (i32, i32) {
    %c0_i32 = arith.constant 0 : i32
    %c0_i32_0 = arith.constant 0 : i32
    return %arg0, %c0_i32 : i32, i32
  }
}

</mosaic_0001>

<llo_original>
// kernel: tpu_custom_call.1
$region0: #{tpu_custom_call.1}
  #allocation0 [shape = 'u32[]', space=smem, size = 0x4, offset = 0x4, fixed_abs, tag = 'smem constant byte address 0x4 - core index']
  #allocation1 [shape = 'u32[144,128]{1,0:T(1,128)}', space=vmem, size = 0x12000, scoped, tag = 'internal scratch']
  %s0 = inlined_call_operand.hbm [shape: f32[2,128], index: 0, kind: input, shape index: {}]
  %s1 = inlined_call_operand.hbm [shape: f32[4,128], index: 1, kind: input, shape index: {}]
  %s2 = inlined_call_operand.hbm [shape: f32[128,128], index: 2, kind: input, shape index: {}]
  %s3 = inlined_call_operand.hbm [shape: f32[128,128], index: 3, kind: input, shape index: {}]
  %s4 = inlined_call_operand.hbm [shape: f32[2,128], index: 4, kind: output, shape index: {}]
  %s5 = sld [smem:[#allocation0]]
  $region42: #{tpu_custom_call.1} parent=0
    _
  %s7 = ssub.s32 1, %s5
  %s8 = scalar_select 0, %s7, %s5
  $region1: #{tpu_custom_call.1} parent=0
    #allocation2 [shape = 'u8[1024]{0}', space=vmem, size = 0x400, scoped, tag = 'input window, operand 0, single buffered']
    #allocation3 [shape = 's32[1]{0}', space=sflag, size = 0x4, scoped, tag = 'scoped memory for tpu_custom_call.1']
    #allocation4 [shape = 's32[1]{0}', space=sflag, size = 0x4, scoped, tag = 'scoped memory for tpu_custom_call.1']
    #allocation5 [shape = 'u8[2048]{0}', space=vmem, size = 0x800, scoped, tag = 'input window, operand 1, single buffered']
    #allocation6 [shape = 's32[1]{0}', space=sflag, size = 0x4, scoped, tag = 'scoped memory for tpu_custom_call.1']
    #allocation7 [shape = 'u8[65536]{0}', space=vmem, size = 0x10000, scoped, tag = 'input window, operand 2, single buffered']
    #allocation8 [shape = 'u8[65536]{0}', space=vmem, size = 0x10000, scoped, tag = 'input window, operand 3, single buffered']
    #allocation9 [shape = 's32[1]{0}', space=sflag, size = 0x4, scoped, tag = 'scoped memory for tpu_custom_call.1']
    #allocation10 [shape = 'u8[1024]{0}', space=vmem, size = 0x400, scoped, tag = 'output window, operand 0, single buffered']
    %9 = vsyncpa [#allocation3], 0
    %10 = vsyncpa [#allocation6], 0
    %11 = vsyncpa [#allocation9], 0
    %12 = vsyncpa [#allocation4], 0
    // Predicated region
    $region2: #{tpu_custom_call.1} parent=1 // pred_check
      _
    $region3: #{tpu_custom_call.1} parent=1 // pred_check_branch
      %14 = sbr.rel (0) target = $region5
    $region4: #{tpu_custom_call.1} parent=1 // pred_region
      %s16 = ssub.s32 32, 32
      %17 = vsyncadd [#allocation3], %s16
      %s19 = sshll.u32 [#allocation2], 4
      %s20 = int_to_ptr.vmem [resolvable:$true] %s19
      %22 = dma.hbm_to_vmem [thread:$0]  %s0, 32, %s20, [#allocation3]
    $region5: #{tpu_custom_call.1} parent=1 // pred_fallthru
      _
    // Predicated region
    $region6: #{tpu_custom_call.1} parent=1 // pred_check
      _
    $region7: #{tpu_custom_call.1} parent=1 // pred_check_branch
      %24 = sbr.rel (0) target = $region9
    $region8: #{tpu_custom_call.1} parent=1 // pred_region
      %s26 = ssub.s32 64, 64
      %27 = vsyncadd [#allocation6], %s26
      %s29 = sshll.u32 [#allocation5], 4
      %s30 = int_to_ptr.vmem [resolvable:$true] %s29
      %32 = dma.hbm_to_vmem [thread:$0]  %s1, 64, %s30, [#allocation6]
    $region9: #{tpu_custom_call.1} parent=1 // pred_fallthru
      _
    // Predicated region
    $region10: #{tpu_custom_call.1} parent=1 // pred_check
      _
    $region11: #{tpu_custom_call.1} parent=1 // pred_check_branch
      %34 = sbr.rel (0) target = $region13
    $region12: #{tpu_custom_call.1} parent=1 // pred_region
      %s36 = ssub.s32 2048, 2048
      %37 = vsyncadd [#allocation6], %s36
      %s38 = sshll.u32 [#allocation7], 4
      %s39 = int_to_ptr.vmem [resolvable:$true] %s38
      %44 = dma.hbm_to_vmem [thread:$0]  %s2, 2048, %s39, [#allocation6], 128, 128, 8
    $region13: #{tpu_custom_call.1} parent=1 // pred_fallthru
      _
    // Predicated region
    $region14: #{tpu_custom_call.1} parent=1 // pred_check
      _
    $region15: #{tpu_custom_call.1} parent=1 // pred_check_branch
      %46 = sbr.rel (0) target = $region17
    $region16: #{tpu_custom_call.1} parent=1 // pred_region
      %s48 = ssub.s32 2048, 2048
      %49 = vsyncadd [#allocation9], %s48
      %s50 = sshll.u32 [#allocation8], 4
      %s51 = int_to_ptr.vmem [resolvable:$true] %s50
      %56 = dma.hbm_to_vmem [thread:$0]  %s3, 2048, %s51, [#allocation9], 128, 128, 8
    $region17: #{tpu_custom_call.1} parent=1 // pred_fallthru
      _
    // Predicated region
    $region18: #{tpu_custom_call.1} parent=1 // pred_check
      _
    $region19: #{tpu_custom_call.1} parent=1 // pred_check_branch
      %58 = sbr.rel (0) target = $region21
    $region20: #{tpu_custom_call.1} parent=1 // pred_region
      %59 = dma.done [#allocation3], 32
    $region21: #{tpu_custom_call.1} parent=1 // pred_fallthru
      _
    // Predicated region
    $region22: #{tpu_custom_call.1} parent=1 // pred_check
      _
    $region23: #{tpu_custom_call.1} parent=1 // pred_check_branch
      %61 = sbr.rel (0) target = $region25
    $region24: #{tpu_custom_call.1} parent=1 // pred_region
      %62 = dma.done [#allocation6], 64
    $region25: #{tpu_custom_call.1} parent=1 // pred_fallthru
      _
    // Predicated region
    $region26: #{tpu_custom_call.1} parent=1 // pred_check
      _
    $region27: #{tpu_custom_call.1} parent=1 // pred_check_branch
      %64 = sbr.rel (0) target = $region29
    $region28: #{tpu_custom_call.1} parent=1 // pred_region
      %65 = dma.done [#allocation6], 2048
    $region29: #{tpu_custom_call.1} parent=1 // pred_fallthru
      _
    // Predicated region
    $region30: #{tpu_custom_call.1} parent=1 // pred_check
      _
    $region31: #{tpu_custom_call.1} parent=1 // pred_check_branch
      %67 = sbr.rel (0) target = $region33
    $region32: #{tpu_custom_call.1} parent=1 // pred_region
      %68 = dma.done [#allocation9], 2048
    $region33: #{tpu_custom_call.1} parent=1 // pred_fallthru
      _
    %v69 = vld [vmem:[#allocation5] sm:$0xf]
    %v70 = vld [vmem:[#allocation2] sm:$0x3]
    %v71 = vlaneseq
    %v72 = vshrl.u32 %v71, 7
    %v73 = vsub.s32 0, %v72
    %v74 = vrot.slane %v69, %v73
    %v75 = vmul.f32 %v70, %v74
    %v76 = vlaneseq
    %v77 = vshrl.u32 %v76, 7
    %v78 = vsub.s32 1, %v77
    %v79 = vrot.slane %v69, %v78
    %v80 = vadd.f32 %v75, %v79
    %v81 = vmax.f32 %v80, 0.0
    %v82 = vld [vmem:[#allocation7] sm:$0xff]
    %v83 = vld [vmem:[#allocation7 + $0x8] sm:$0xff]
    %v84 = vld [vmem:[#allocation7 + $0x10] sm:$0xff]
    %v85 = vld [vmem:[#allocation7 + $0x18] sm:$0xff]
    %v86 = vld [vmem:[#allocation7 + $0x20] sm:$0xff]
    %v87 = vld [vmem:[#allocation7 + $0x28] sm:$0xff]
    %v88 = vld [vmem:[#allocation7 + $0x30] sm:$0xff]
    %v89 = vld [vmem:[#allocation7 + $0x38] sm:$0xff]
    %v90 = vld [vmem:[#allocation7 + $0x40] sm:$0xff]
    %v91 = vld [vmem:[#allocation7 + $0x48] sm:$0xff]
    %v92 = vld [vmem:[#allocation7 + $0x50] sm:$0xff]
    %v93 = vld [vmem:[#allocation7 + $0x58] sm:$0xff]
    %v94 = vld [vmem:[#allocation7 + $0x60] sm:$0xff]
    %v95 = vld [vmem:[#allocation7 + $0x68] sm:$0xff]
    %v96 = vld [vmem:[#allocation7 + $0x70] sm:$0xff]
    %v97 = vld [vmem:[#allocation7 + $0x78] sm:$0xff]
    %98 = vmatprep.subr.mxu0 0.0
    %99 = vmatpush1.msra.mxu0 %v82
    %100 = vmatprep.subr.mxu0 0.0
    %101 = vmatpush1.msra.mxu0 %v83
    %102 = vmatprep.subr.mxu0 0.0
    %103 = vmatpush1.msra.mxu0 %v84
    %104 = vmatprep.subr.mxu0 0.0
    %105 = vmatpush1.msra.mxu0 %v85
    %106 = vmatprep.subr.mxu0 0.0
    %107 = vmatpush1.msra.mxu0 %v86
    %108 = vmatprep.subr.mxu0 0.0
    %109 = vmatpush1.msra.mxu0 %v87
    %110 = vmatprep.subr.mxu0 0.0
    %111 = vmatpush1.msra.mxu0 %v88
    %112 = vmatprep.subr.mxu0 0.0
    %113 = vmatpush1.msra.mxu0 %v89
    %114 = vmatprep.subr.mxu0 0.0
    %115 = vmatpush1.msra.mxu0 %v90
    %116 = vmatprep.subr.mxu0 0.0
    %117 = vmatpush1.msra.mxu0 %v91
    %118 = vmatprep.subr.mxu0 0.0
    %119 = vmatpush1.msra.mxu0 %v92
    %120 = vmatprep.subr.mxu0 0.0
    %121 = vmatpush1.msra.mxu0 %v93
    %122 = vmatprep.subr.mxu0 0.0
    %123 = vmatpush1.msra.mxu0 %v94
    %124 = vmatprep.subr.mxu0 0.0
    %125 = vmatpush1.msra.mxu0 %v95
    %126 = vmatprep.subr.mxu0 0.0
    %127 = vmatpush1.msra.mxu0 %v96
    %128 = vmatprep.subr.mxu0 0.0
    %129 = vmatpush1.msra.mxu0 %v97
    %130 = vmatprep.subr.mxu0 0.0
    %131 = vmatpush1.msra.mxu0 0.0
    %132 = vmatprep.subr.mxu0 0.0
    %133 = vmatpush1.msra.mxu0 0.0
    %134 = vmatprep.subr.mxu0 0.0
    %135 = vmatpush1.msra.mxu0 0.0
    %136 = vmatprep.subr.mxu0 0.0
    %137 = vmatpush1.msra.mxu0 0.0
    %138 = vmatprep.subr.mxu0 0.0
    %139 = vmatpush1.msra.mxu0 0.0
    %140 = vmatprep.subr.mxu0 0.0
    %141 = vmatpush1.msra.mxu0 0.0
    %142 = vmatprep.subr.mxu0 0.0
    %143 = vmatpush1.msra.mxu0 0.0
    %144 = vmatprep.subr.mxu0 0.0
    %145 = vmatpush1.msra.mxu0 0.0
    %146 = vmatprep.subr.mxu0 0.0
    %147 = vmatpush1.msra.mxu0 0.0
    %148 = vmatprep.subr.mxu0 0.0
    %149 = vmatpush1.msra.mxu0 0.0
    %150 = vmatprep.subr.mxu0 0.0
    %151 = vmatpush1.msra.mxu0 0.0
    %152 = vmatprep.subr.mxu0 0.0
    %153 = vmatpush1.msra.mxu0 0.0
    %154 = vmatprep.subr.mxu0 0.0
    %155 = vmatpush1.msra.mxu0 0.0
    %156 = vmatprep.subr.mxu0 0.0
    %157 = vmatpush1.msra.mxu0 0.0
    %158 = vmatprep.subr.mxu0 0.0
    %159 = vmatpush1.msra.mxu0 0.0
    %160 = vmatprep.subr.mxu0 0.0
    %161 = vmatpush1.msra.mxu0 0.0
    %162 = vmatprep.mubr.f32.mxu0 0.0
    %163 = vmatmul.mubr.f32.gmra.mrb[0].mxu0 %v81
    %v164 = vpop.f32.mrb[0].mxu0
    %v165 = vadd.f32 0.0, %v164
    %v166 = vpop.f32.mrb[0].mxu0
    %167 = vdwg.mxu0
    %v168 = vlaneseq
    %v169 = vshrl.u32 %v168, 7
    %v170 = vsub.s32 2, %v169
    %v171 = vrot.slane %v69, %v170
    %v172 = vmul.f32 %v165, %v171
    %v173 = vlaneseq
    %v174 = vshrl.u32 %v173, 7
    %v175 = vsub.s32 3, %v174
    %v176 = vrot.slane %v69, %v175
    %v177 = vadd.f32 %v172, %v176
    %v178 = vmax.f32 %v177, 0.0
    %v179 = vld [vmem:[#allocation8] sm:$0xff]
    %v180 = vld [vmem:[#allocation8 + $0x8] sm:$0xff]
    %v181 = vld [vmem:[#allocation8 + $0x10] sm:$0xff]
    %v182 = vld [vmem:[#allocation8 + $0x18] sm:$0xff]
    %v183 = vld [vmem:[#allocation8 + $0x20] sm:$0xff]
    %v184 = vld [vmem:[#allocation8 + $0x28] sm:$0xff]
    %v185 = vld [vmem:[#allocation8 + $0x30] sm:$0xff]
    %v186 = vld [vmem:[#allocation8 + $0x38] sm:$0xff]
    %v187 = vld [vmem:[#allocation8 + $0x40] sm:$0xff]
    %v188 = vld [vmem:[#allocation8 + $0x48] sm:$0xff]
    %v189 = vld [vmem:[#allocation8 + $0x50] sm:$0xff]
    %v190 = vld [vmem:[#allocation8 + $0x58] sm:$0xff]
    %v191 = vld [vmem:[#allocation8 + $0x60] sm:$0xff]
    %v192 = vld [vmem:[#allocation8 + $0x68] sm:$0xff]
    %v193 = vld [vmem:[#allocation8 + $0x70] sm:$0xff]
    %v194 = vld [vmem:[#allocation8 + $0x78] sm:$0xff]
    %195 = vmatprep.subr.mxu0 0.0
    %196 = vmatpush1.msra.mxu0 %v179
    %197 = vmatprep.subr.mxu0 0.0
    %198 = vmatpush1.msra.mxu0 %v180
    %199 = vmatprep.subr.mxu0 0.0
    %200 = vmatpush1.msra.mxu0 %v181
    %201 = vmatprep.subr.mxu0 0.0
    %202 = vmatpush1.msra.mxu0 %v182
    %203 = vmatprep.subr.mxu0 0.0
    %204 = vmatpush1.msra.mxu0 %v183
    %205 = vmatprep.subr.mxu0 0.0
    %206 = vmatpush1.msra.mxu0 %v184
    %207 = vmatprep.subr.mxu0 0.0
    %208 = vmatpush1.msra.mxu0 %v185
    %209 = vmatprep.subr.mxu0 0.0
    %210 = vmatpush1.msra.mxu0 %v186
    %211 = vmatprep.subr.mxu0 0.0
    %212 = vmatpush1.msra.mxu0 %v187
    %213 = vmatprep.subr.mxu0 0.0
    %214 = vmatpush1.msra.mxu0 %v188
    %215 = vmatprep.subr.mxu0 0.0
    %216 = vmatpush1.msra.mxu0 %v189
    %217 = vmatprep.subr.mxu0 0.0
    %218 = vmatpush1.msra.mxu0 %v190
    %219 = vmatprep.subr.mxu0 0.0
    %220 = vmatpush1.msra.mxu0 %v191
    %221 = vmatprep.subr.mxu0 0.0
    %222 = vmatpush1.msra.mxu0 %v192
    %223 = vmatprep.subr.mxu0 0.0
    %224 = vmatpush1.msra.mxu0 %v193
    %225 = vmatprep.subr.mxu0 0.0
    %226 = vmatpush1.msra.mxu0 %v194
    %227 = vmatprep.subr.mxu0 0.0
    %228 = vmatpush1.msra.mxu0 0.0
    %229 = vmatprep.subr.mxu0 0.0
    %230 = vmatpush1.msra.mxu0 0.0
    %231 = vmatprep.subr.mxu0 0.0
    %232 = vmatpush1.msra.mxu0 0.0
    %233 = vmatprep.subr.mxu0 0.0
    %234 = vmatpush1.msra.mxu0 0.0
    %235 = vmatprep.subr.mxu0 0.0
    %236 = vmatpush1.msra.mxu0 0.0
    %237 = vmatprep.subr.mxu0 0.0
    %238 = vmatpush1.msra.mxu0 0.0
    %239 = vmatprep.subr.mxu0 0.0
    %240 = vmatpush1.msra.mxu0 0.0
    %241 = vmatprep.subr.mxu0 0.0
    %242 = vmatpush1.msra.mxu0 0.0
    %243 = vmatprep.subr.mxu0 0.0
    %244 = vmatpush1.msra.mxu0 0.0
    %245 = vmatprep.subr.mxu0 0.0
    %246 = vmatpush1.msra.mxu0 0.0
    %247 = vmatprep.subr.mxu0 0.0
    %248 = vmatpush1.msra.mxu0 0.0
    %249 = vmatprep.subr.mxu0 0.0
    %250 = vmatpush1.msra.mxu0 0.0
    %251 = vmatprep.subr.mxu0 0.0
    %252 = vmatpush1.msra.mxu0 0.0
    %253 = vmatprep.subr.mxu0 0.0
    %254 = vmatpush1.msra.mxu0 0.0
    %255 = vmatprep.subr.mxu0 0.0
    %256 = vmatpush1.msra.mxu0 0.0
    %257 = vmatprep.subr.mxu0 0.0
    %258 = vmatpush1.msra.mxu0 0.0
    %259 = vmatprep.mubr.f32.mxu0 0.0
    %260 = vmatmul.mubr.f32.gmra.mrb[0].mxu0 %v178
    %v261 = vpop.f32.mrb[0].mxu0
    %v262 = vadd.f32 %v70, %v261
    %v263 = vpop.f32.mrb[0].mxu0
    %264 = vdwg.mxu0
    %265 = vst [vmem:[#allocation10] sm:$0x3] %v262
    // Predicated region
    $region34: #{tpu_custom_call.1} parent=1 // pred_check
      _
    $region35: #{tpu_custom_call.1} parent=1 // pred_check_branch
      %267 = sbr.rel (0) target = $region37
    $region36: #{tpu_custom_call.1} parent=1 // pred_region
      %s269 = ssub.s32 32, 32
      %270 = vsyncadd [#allocation4], %s269
      %s272 = sshll.u32 [#allocation10], 4
      %s273 = int_to_ptr.vmem [resolvable:$true] %s272
      %275 = dma.vmem_to_hbm [thread:$0]  %s273, 32, %s4, [#allocation4]
    $region37: #{tpu_custom_call.1} parent=1 // pred_fallthru
      _
    // Predicated region
    $region38: #{tpu_custom_call.1} parent=1 // pred_check
      _
    $region39: #{tpu_custom_call.1} parent=1 // pred_check_branch
      %277 = sbr.rel (0) target = $region41
    $region40: #{tpu_custom_call.1} parent=1 // pred_region
      %278 = dma.done [#allocation4], 32
    $region41: #{tpu_custom_call.1} parent=1 // pred_fallthru
      _
    %279 = vsyncpa [#allocation3], 1
    %280 = vsyncpa [#allocation6], 1
    %281 = vsyncpa [#allocation9], 1
    %282 = vsyncpa [#allocation4], 1

</llo_original>
